<compile_context>
chip_gen: v5e
topology: v5e:2x2
jax: 0.10.0
libtpu: 0.0.40
codegen_flags: <defaults>
</compile_context>

<pallas_src>
import jax
import jax.numpy as jnp
from jax.experimental import pallas as pl
from jax.experimental.pallas import tpu as pltpu

LANE = 128
MAX_BLOCK_ROWS = 8192   # (8192,128) f32 block = 4 MiB; 2 inputs x 2 buffers = 16 MiB VMEM


def _round_up(a, b):
    return -(-a // b) * b


def _sublane_mult(dtype):
    # Min sublane tile: 8 for 32-bit, 16 for 16-bit, 32 for 8-bit dtypes.
    return {4: 8, 2: 16, 1: 32}.get(jnp.dtype(dtype).itemsize, 8)


@jax.jit
def bbce_loss_pallas(inp, label):
    assert inp.shape == label.shape
    n = inp.size

    x = inp.reshape(-1)      # free (bitcast) reshape, native dtype
    y = label.reshape(-1)    # free (bitcast) reshape, native dtype

    # Pad only to the lane boundary (<=127 elements). Zero pads contribute exactly
    # 0 to every accumulator (x=0, y=0 -> nll = -log(1) = 0), so no mask is needed
    # for them; the common case (n % 128 == 0) is fully zero-copy.
    n_lane = _round_up(n, LANE)
    if n_lane != n:
        x = jnp.pad(x, (0, n_lane - n))
        y = jnp.pad(y, (0, n_lane - n))
    rows = n_lane // LANE

    sub = max(_sublane_mult(x.dtype), _sublane_mult(y.dtype))
    tm = min(MAX_BLOCK_ROWS, _round_up(rows, sub))
    n_blocks = -(-rows // tm)          # total row-tiles
    tpc = -(-n_blocks // 2)            # tiles per core (2-way megacore split)
    # In-kernel masking is only traced in when a ragged last tile exists or the
    # 2-way split creates a (clamped, fully-masked) duplicate tile.
    needs_mask = (n_blocks * tm != rows) or (2 * tpc != n_blocks)

    x2 = x.reshape(rows, LANE)
    y2 = y.reshape(rows, LANE)

    def kernel(x_ref, y_ref, c1_ref, sp_ref, sn_ref):
        c = pl.program_id(0)   # core (parallel) axis
        t = pl.program_id(1)   # streaming (arbitrary/reduction) axis

        @pl.when(t == 0)
        def _init():
            c1_ref[...] = jnp.zeros_like(c1_ref)
            sp_ref[...] = jnp.zeros_like(sp_ref)
            sn_ref[...] = jnp.zeros_like(sn_ref)

        xv = x_ref[...]
        yv = y_ref[...]
        pos = yv != 0                          # works for float / int / bool 0-1 labels
        xf = xv.astype(jnp.float32)            # upcast in-register (free if already f32)
        yf = yv.astype(jnp.float32)            # labels are 0/1 -> doubles as the positive count

        # One log per element, clamped at -100 to match torch.nn.BCELoss.
        nll = -jnp.maximum(jnp.log(jnp.where(pos, xf, 1.0 - xf)), -100.0)

        if needs_mask:
            # Unclamped logical tile index: rows past `rows` (ragged tail or the
            # clamped duplicate tile of the 2-way split) are zeroed out.
            tile = c * tpc + t
            rid = tile * tm + jax.lax.broadcasted_iota(jnp.int32, (tm, LANE), 0)
            ok = rid < rows
            nll = jnp.where(ok, nll, 0.0)
            yf = jnp.where(ok, yf, 0.0)

        sp = nll * yf            # -log(x)   on positives, 0 on negatives
        sn = nll - sp            # -log(1-x) on negatives, 0 on positives

        if tm % 64 == 0 and tm >= 512:
            # Two-stage fold: 8 independent add chains of tm/64, then a chain of 8
            # (keeps the dependent vfadd chain off the critical path at big tiles).
            def fold(a):
                return a.reshape(-1, 8, 8, LANE).sum(axis=0).sum(axis=0)
        else:
            def fold(a):
                return a.reshape(-1, 8, LANE).sum(axis=0)

        c1_ref[...] += fold(yf)[None]
        sp_ref[...] += fold(sp)[None]
        sn_ref[...] += fold(sn)[None]

    # Clamp fully-out-of-range tiles (odd n_blocks with the 2-way split) to the
    # last valid block; their contribution is masked to zero in the kernel.
    in_spec = pl.BlockSpec(
        (tm, LANE), lambda c, t: (jnp.minimum(c * tpc + t, n_blocks - 1), 0))
    # Per-core resident accumulator blocks: core c owns slab c of the (2,8,128) output.
    acc_spec = pl.BlockSpec((1, 8, LANE), lambda c, t: (c, 0, 0))
    acc_shape = jax.ShapeDtypeStruct((2, 8, LANE), jnp.float32)

    bytes_accessed = int(x2.size * x2.dtype.itemsize + y2.size * y2.dtype.itemsize)

    # TODO(synk): if xprof shows exposed DMA at these tile sizes, add
    # pipeline_mode=pl.Buffered(3) to the input specs (measured follow-up only).
    c1p, spp, snp = pl.pallas_call(
        kernel,
        out_shape=(acc_shape, acc_shape, acc_shape),
        grid_spec=pltpu.PrefetchScalarGridSpec(
            num_scalar_prefetch=0,
            grid=(2, tpc),
            in_specs=[in_spec, in_spec],
            out_specs=(acc_spec, acc_spec, acc_spec)),
        compiler_params=pltpu.CompilerParams(
            dimension_semantics=("parallel", "arbitrary"),
            vmem_limit_bytes=48 * 1024 * 1024),
        cost_estimate=pl.CostEstimate(
            flops=10 * n, transcendentals=n, bytes_accessed=bytes_accessed),
    )(x2, y2)

    # Scalar glue (mirrors the PyTorch one-hot bookkeeping for binary labels):
    #   C            = label.max() + 1  -> 1 + (c1 > 0)      (no host readback)
    #   numel(label) = n * C
    #   num_classes  = #classes with occurrences > 0
    #   coef_c       = (1/occ_c) * n*C / (num_classes * label.shape[1])
    c1 = jnp.sum(c1p)                   # elements of class 1
    c0 = jnp.float32(n) - c1            # elements of class 0
    s_pos = jnp.sum(spp)                # sum of -log(x)   over class-1 elements
    s_neg = jnp.sum(snp)                # sum of -log(1-x) over class-0 elements

    num_present = (c0 > 0).astype(jnp.float32) + (c1 > 0).astype(jnp.float32)
    c_classes = 1.0 + (c1 > 0).astype(jnp.float32)
    label_dim1 = jnp.float32(inp.shape[1]) if inp.ndim > 1 else c_classes
    scale = (n * c_classes) / (num_present * label_dim1)
    coef0 = scale / jnp.maximum(c0, 1.0)   # guard only hit for an empty (unused) class
    coef1 = scale / jnp.maximum(c1, 1.0)
    return (coef1 * s_pos + coef0 * s_neg) / n


def bbce_loss_ref(x, y):
    """Pure-JAX reference mirroring the PyTorch module (run eagerly)."""
    x = x.astype(jnp.float32)
    y = y.astype(jnp.float32)
    c = int(jnp.max(y)) + 1
    label = jax.nn.one_hot(y.astype(jnp.int32), c)                 # (..., C)
    class_occ = jnp.sum(label, axis=tuple(range(y.ndim)))          # (C,)
    num_classes = jnp.sum(class_occ > 0)
    coef = (1.0 / class_occ) * label.size / (num_classes * label.shape[1])
    integers = jnp.argmax(label, axis=-1)
    wmap = coef[integers]
    log_x = jnp.maximum(jnp.log(x), -100.0)
    log_1mx = jnp.maximum(jnp.log(1.0 - x), -100.0)
    loss = -(y * log_x + (1.0 - y) * log_1mx)
    return jnp.mean(loss * wmap)


if __name__ == "__main__":
    key = jax.random.PRNGKey(0)
    kx, ky = jax.random.split(key)

    # 1) f32 probabilities / f32 binary labels, n multiple of 128 -> zero-copy path.
    shape = (2, 4, 16, 16)
    x = jax.nn.sigmoid(jax.random.normal(kx, shape, jnp.float32))
    y = (jax.random.uniform(ky, shape) > 0.7).astype(jnp.float32)
    out = jax.block_until_ready(bbce_loss_pallas(x, y))
    ref = jax.block_until_ready(bbce_loss_ref(x, y))
    assert jnp.allclose(out, ref, rtol=1e-4, atol=1e-6), (out, ref)

    # 2) Ragged n (not a multiple of 128) -> <=127-element lane pad + in-kernel row mask.
    shape2 = (2, 3, 15, 15)
    x2 = jax.nn.sigmoid(jax.random.normal(kx, shape2, jnp.float32))
    y2 = (jax.random.uniform(ky, shape2) > 0.6).astype(jnp.float32)
    out2 = jax.block_until_ready(bbce_loss_pallas(x2, y2))
    ref2 = jax.block_until_ready(bbce_loss_ref(x2, y2))
    assert jnp.allclose(out2, ref2, rtol=1e-4, atol=1e-6), (out2, ref2)

    # 3) Native bf16 probabilities (no wrapper upcast; kernel upcasts in-register).
    xb = x.astype(jnp.bfloat16)
    out3 = jax.block_until_ready(bbce_loss_pallas(xb, y))
    ref3 = jax.block_until_ready(bbce_loss_ref(xb, y))
    assert jnp.allclose(out3, ref3, rtol=1e-4, atol=1e-6), (out3, ref3)

    print("KERNEL_OK")
</pallas_src>

<mosaic_0001>
module attributes {stable_mosaic.version = 11 : i64} {
  func.func @kernel(%arg0: i32, %arg1: i32, %arg2: memref<16x128xf32, #tpu.memory_space<vmem>>, %arg3: memref<16x128xf32, #tpu.memory_space<vmem>>, %arg4: memref<1x8x128xf32, #tpu.memory_space<vmem>>, %arg5: memref<1x8x128xf32, #tpu.memory_space<vmem>>, %arg6: memref<1x8x128xf32, #tpu.memory_space<vmem>>) attributes {dimension_semantics = [#tpu.dimension_semantics<parallel>, #tpu.dimension_semantics<arbitrary>], iteration_bounds = array<i64: 2, 1>, scalar_prefetch = 0 : i64, scratch_operands = 0 : i64, tpu.core_type = #tpu.core_type<tc>, window_params = [{transform_indices = @transform_0, window_bounds = array<i64: 16, 128>}, {transform_indices = @transform_1, window_bounds = array<i64: 16, 128>}, {transform_indices = @transform_2, window_bounds = array<i64: 1, 8, 128>}, {transform_indices = @transform_3, window_bounds = array<i64: 1, 8, 128>}, {transform_indices = @transform_4, window_bounds = array<i64: 1, 8, 128>}]} {
    %c0_i32 = arith.constant 0 : i32
    %0 = arith.cmpi eq, %arg1, %c0_i32 : i32
    %1 = arith.extui %0 : i1 to i32
    %c0_i32_0 = arith.constant 0 : i32
    %2 = arith.cmpi ne, %1, %c0_i32_0 : i32
    scf.if %2 {
      %cst_31 = arith.constant 0.000000e+00 : f32
      %47 = vector.broadcast %cst_31 : f32 to vector<1x8x128xf32>
      %c0_32 = arith.constant 0 : index
      %c0_33 = arith.constant 0 : index
      %c0_34 = arith.constant 0 : index
      %48 = vector.load %arg4[%c0_32, %c0_33, %c0_34] : memref<1x8x128xf32, #tpu.memory_space<vmem>>, vector<1x8x128xf32>
      tpu.vector_store %arg4[%c0_32, %c0_33, %c0_34], %47 {strides = array<i32>} : memref<1x8x128xf32, #tpu.memory_space<vmem>>, vector<1x8x128xf32>,
      %cst_35 = arith.constant 0.000000e+00 : f32
      %49 = vector.broadcast %cst_35 : f32 to vector<1x8x128xf32>
      %c0_36 = arith.constant 0 : index
      %c0_37 = arith.constant 0 : index
      %c0_38 = arith.constant 0 : index
      %50 = vector.load %arg5[%c0_36, %c0_37, %c0_38] : memref<1x8x128xf32, #tpu.memory_space<vmem>>, vector<1x8x128xf32>
      tpu.vector_store %arg5[%c0_36, %c0_37, %c0_38], %49 {strides = array<i32>} : memref<1x8x128xf32, #tpu.memory_space<vmem>>, vector<1x8x128xf32>,
      %cst_39 = arith.constant 0.000000e+00 : f32
      %51 = vector.broadcast %cst_39 : f32 to vector<1x8x128xf32>
      %c0_40 = arith.constant 0 : index
      %c0_41 = arith.constant 0 : index
      %c0_42 = arith.constant 0 : index
      %52 = vector.load %arg6[%c0_40, %c0_41, %c0_42] : memref<1x8x128xf32, #tpu.memory_space<vmem>>, vector<1x8x128xf32>
      tpu.vector_store %arg6[%c0_40, %c0_41, %c0_42], %51 {strides = array<i32>} : memref<1x8x128xf32, #tpu.memory_space<vmem>>, vector<1x8x128xf32>,
    } else {
    }
    %c0 = arith.constant 0 : index
    %c0_1 = arith.constant 0 : index
    %3 = vector.load %arg2[%c0, %c0_1] : memref<16x128xf32, #tpu.memory_space<vmem>>, vector<16x128xf32>
    %c0_2 = arith.constant 0 : index
    %c0_3 = arith.constant 0 : index
    %4 = vector.load %arg3[%c0_2, %c0_3] : memref<16x128xf32, #tpu.memory_space<vmem>>, vector<16x128xf32>
    %cst = arith.constant 0.000000e+00 : f32
    %5 = vector.broadcast %cst : f32 to vector<16x128xf32>
    %6 = arith.cmpf one, %4, %5 : vector<16x128xf32>
    %cst_4 = arith.constant 1.000000e+00 : f32
    %7 = vector.broadcast %cst_4 : f32 to vector<16x128xf32>
    %8 = arith.subf %7, %3 : vector<16x128xf32>
    %9 = arith.select %6, %3, %8 : vector<16x128xi1>, vector<16x128xf32>
    %10 = math.log %9 : vector<16x128xf32>
    %cst_5 = arith.constant -1.000000e+02 : f32
    %11 = vector.broadcast %cst_5 : f32 to vector<16x128xf32>
    %12 = arith.maximumf %10, %11 : vector<16x128xf32>
    %cst_6 = arith.constant 0.000000e+00 : f32
    %13 = vector.broadcast %cst_6 : f32 to vector<16x128xf32>
    %14 = arith.subf %13, %12 : vector<16x128xf32>
    %c1_i32 = arith.constant 1 : i32
    %15 = arith.muli %arg0, %c1_i32 : i32
    %16 = arith.addi %15, %arg1 : i32
    %c16_i32 = arith.constant 16 : i32
    %17 = arith.muli %16, %c16_i32 : i32
    %18 = tpu.iota {dimensions = array<i32: 0>} : vector<16x128xi32>
    %19 = vector.broadcast %17 : i32 to vector<16x128xi32>
    %20 = arith.addi %19, %18 : vector<16x128xi32>
    %c16_i32_7 = arith.constant 16 : i32
    %21 = vector.broadcast %c16_i32_7 : i32 to vector<16x128xi32>
    %22 = arith.cmpi slt, %20, %21 : vector<16x128xi32>
    %cst_8 = arith.constant 0.000000e+00 : f32
    %23 = vector.broadcast %cst_8 : f32 to vector<16x128xf32>
    %24 = arith.select %22, %14, %23 : vector<16x128xi1>, vector<16x128xf32>
    %cst_9 = arith.constant 0.000000e+00 : f32
    %25 = vector.broadcast %cst_9 : f32 to vector<16x128xf32>
    %26 = arith.select %22, %4, %25 : vector<16x128xi1>, vector<16x128xf32>
    %27 = arith.mulf %24, %26 : vector<16x128xf32>
    %28 = arith.subf %24, %27 : vector<16x128xf32>
    %c0_10 = arith.constant 0 : index
    %c0_11 = arith.constant 0 : index
    %c0_12 = arith.constant 0 : index
    %29 = vector.load %arg4[%c0_10, %c0_11, %c0_12] : memref<1x8x128xf32, #tpu.memory_space<vmem>>, vector<1x8x128xf32>
    %30 = vector.shape_cast %26 : vector<16x128xf32> to vector<2x8x128xf32>
    %cst_13 = arith.constant dense<0.000000e+00> : vector<8x128xf32>
    %31 = vector.multi_reduction <add>, %30, %cst_13 [0] : vector<2x8x128xf32> to vector<8x128xf32>
    %32 = vector.shape_cast %31 : vector<8x128xf32> to vector<1x8x128xf32>
    %33 = arith.addf %29, %32 : vector<1x8x128xf32>
    %c0_14 = arith.constant 0 : index
    %c0_15 = arith.constant 0 : index
    %c0_16 = arith.constant 0 : index
    %34 = vector.load %arg4[%c0_14, %c0_15, %c0_16] : memref<1x8x128xf32, #tpu.memory_space<vmem>>, vector<1x8x128xf32>
    tpu.vector_store %arg4[%c0_14, %c0_15, %c0_16], %33 {strides = array<i32>} : memref<1x8x128xf32, #tpu.memory_space<vmem>>, vector<1x8x128xf32>,
    %c0_17 = arith.constant 0 : index
    %c0_18 = arith.constant 0 : index
    %c0_19 = arith.constant 0 : index
    %35 = vector.load %arg5[%c0_17, %c0_18, %c0_19] : memref<1x8x128xf32, #tpu.memory_space<vmem>>, vector<1x8x128xf32>
    %36 = vector.shape_cast %27 : vector<16x128xf32> to vector<2x8x128xf32>
    %cst_20 = arith.constant dense<0.000000e+00> : vector<8x128xf32>
    %37 = vector.multi_reduction <add>, %36, %cst_20 [0] : vector<2x8x128xf32> to vector<8x128xf32>
    %38 = vector.shape_cast %37 : vector<8x128xf32> to vector<1x8x128xf32>
    %39 = arith.addf %35, %38 : vector<1x8x128xf32>
    %c0_21 = arith.constant 0 : index
    %c0_22 = arith.constant 0 : index
    %c0_23 = arith.constant 0 : index
    %40 = vector.load %arg5[%c0_21, %c0_22, %c0_23] : memref<1x8x128xf32, #tpu.memory_space<vmem>>, vector<1x8x128xf32>
    tpu.vector_store %arg5[%c0_21, %c0_22, %c0_23], %39 {strides = array<i32>} : memref<1x8x128xf32, #tpu.memory_space<vmem>>, vector<1x8x128xf32>,
    %c0_24 = arith.constant 0 : index
    %c0_25 = arith.constant 0 : index
    %c0_26 = arith.constant 0 : index
    %41 = vector.load %arg6[%c0_24, %c0_25, %c0_26] : memref<1x8x128xf32, #tpu.memory_space<vmem>>, vector<1x8x128xf32>
    %42 = vector.shape_cast %28 : vector<16x128xf32> to vector<2x8x128xf32>
    %cst_27 = arith.constant dense<0.000000e+00> : vector<8x128xf32>
    %43 = vector.multi_reduction <add>, %42, %cst_27 [0] : vector<2x8x128xf32> to vector<8x128xf32>
    %44 = vector.shape_cast %43 : vector<8x128xf32> to vector<1x8x128xf32>
    %45 = arith.addf %41, %44 : vector<1x8x128xf32>
    %c0_28 = arith.constant 0 : index
    %c0_29 = arith.constant 0 : index
    %c0_30 = arith.constant 0 : index
    %46 = vector.load %arg6[%c0_28, %c0_29, %c0_30] : memref<1x8x128xf32, #tpu.memory_space<vmem>>, vector<1x8x128xf32>
    tpu.vector_store %arg6[%c0_28, %c0_29, %c0_30], %45 {strides = array<i32>} : memref<1x8x128xf32, #tpu.memory_space<vmem>>, vector<1x8x128xf32>,
    return
  }
  func.func @transform_0(%arg0: i32, %arg1: i32) -> (i32, i32) {
    %c1_i32 = arith.constant 1 : i32
    %0 = arith.muli %arg0, %c1_i32 : i32
    %1 = arith.addi %0, %arg1 : i32
    %c0_i32 = arith.constant 0 : i32
    %2 = arith.minsi %1, %c0_i32 : i32
    %c0_i32_0 = arith.constant 0 : i32
    %c0_i32_1 = arith.constant 0 : i32
    return %2, %c0_i32_0 : i32, i32
  }
  func.func @transform_1(%arg0: i32, %arg1: i32) -> (i32, i32) {
    %c1_i32 = arith.constant 1 : i32
    %0 = arith.muli %arg0, %c1_i32 : i32
    %1 = arith.addi %0, %arg1 : i32
    %c0_i32 = arith.constant 0 : i32
    %2 = arith.minsi %1, %c0_i32 : i32
    %c0_i32_0 = arith.constant 0 : i32
    %c0_i32_1 = arith.constant 0 : i32
    return %2, %c0_i32_0 : i32, i32
  }
  func.func @transform_2(%arg0: i32, %arg1: i32) -> (i32, i32, i32) {
    %c0_i32 = arith.constant 0 : i32
    %c0_i32_0 = arith.constant 0 : i32
    %c0_i32_1 = arith.constant 0 : i32
    return %arg0, %c0_i32, %c0_i32_0 : i32, i32, i32
  }
  func.func @transform_3(%arg0: i32, %arg1: i32) -> (i32, i32, i32) {
    %c0_i32 = arith.constant 0 : i32
    %c0_i32_0 = arith.constant 0 : i32
    %c0_i32_1 = arith.constant 0 : i32
    return %arg0, %c0_i32, %c0_i32_0 : i32, i32, i32
  }
  func.func @transform_4(%arg0: i32, %arg1: i32) -> (i32, i32, i32) {
    %c0_i32 = arith.constant 0 : i32
    %c0_i32_0 = arith.constant 0 : i32
    %c0_i32_1 = arith.constant 0 : i32
    return %arg0, %c0_i32, %c0_i32_0 : i32, i32, i32
  }
}

</mosaic_0001>

<llo_original>
// kernel: bbce_loss_pallas.1
$region0: #{bbce_loss_pallas.1}
  #allocation0 [shape = 'u32[]', space=smem, size = 0x4, offset = 0x4, fixed_abs, tag = 'smem constant byte address 0x4 - core index']
  #allocation1 [shape = 'u32[72,128]{1,0:T(1,128)}', space=vmem, size = 0x9000, scoped, tag = 'internal scratch']
  %s0 = inlined_call_operand.vmem [shape: f32[16,128], index: 0, kind: input, shape index: {}]
  %s1 = inlined_call_operand.vmem [shape: f32[16,128], index: 1, kind: input, shape index: {}]
  %s2 = inlined_call_operand.vmem [shape: f32[2,8,128], index: 2, kind: output, shape index: {0}]
  %s3 = inlined_call_operand.vmem [shape: f32[2,8,128], index: 3, kind: output, shape index: {1}]
  %s4 = inlined_call_operand.vmem [shape: f32[2,8,128], index: 4, kind: output, shape index: {2}]
  %5 = xla_tuple %s2, %s3, %s4
  %s6 = sld [smem:[#allocation0]]
  $region61: #{bbce_loss_pallas.1} parent=0
    _
  %s8 = ssub.s32 1, %s6
  %s9 = scalar_select 0, %s8, %s6
  loop: start=0, step=1, limit=4
  $region2: #{bbce_loss_pallas.1} parent=0 // loop_pre_header
    _
  $region3: #{bbce_loss_pallas.1} parent=0 // loop_header
    %s11 = sphi 0, %s15
    %p12 = scmp.ge.s32.totalorder %s11, 4
    %s18 = sphi 0, %s30
    %s19 = sphi 0, %s26
    %s20 = sphi 0, %s18
    %s21 = sphi 0, %s19
    %s22 = sphi 0, %s20
    %s23 = sphi 0, %s21
    %s39 = sphi 0, %s41
    %s42 = sphi 0, %s39
    %s43 = sphi 0, %s42
    %s59 = sphi 0, %s43
    %s71 = sphi 0, %s73
    %s74 = sphi 0, %s71
    %s75 = sphi 0, %s74
    %s91 = sphi 0, %s75
    %s97 = sphi 0, %s99
    %s100 = sphi 0, %s97
    %s101 = sphi 0, %s100
    %s117 = sphi 0, %s101
    %s123 = sphi 0, %s125
    %s126 = sphi 0, %s123
    %s127 = sphi 0, %s126
    %s143 = sphi 0, %s127
    %s149 = sphi 0, %s151
    %s152 = sphi 0, %s149
    %s153 = sphi 0, %s152
    %s169 = sphi 0, %s153
  $region4: #{bbce_loss_pallas.1} parent=0 // loop_header_branch
    %14 = sbr.rel (%p12) target = $region8
  $region5: #{bbce_loss_pallas.1} parent=0 // loop_body
    %s16 = ssub.s32 %s11, 1
    %s17 = ssub.s32 %s11, 2
    %s24 = sadd.s32 1, %s19
    %p25 = scmp.ge.s32.totalorder %s24, 1
    %s26 = scalar_select %p25, 0, %s24
    %s27 = sadd.s32 1, %s18
    %s28 = scalar_select %p25, %s27, %s18
    %p29 = scmp.ge.s32.totalorder %s28, 2
    %s30 = scalar_select %p29, 0, %s28
    %s31 = sadd.s32 %s18, %s19
    %p32 = scmp.lt.s32.totalorder %s31, 0
    %s33 = scalar_select %p32, %s31, 0
    %s34 = sadd.s32 %s30, %s26
    %p35 = scmp.lt.s32.totalorder %s34, 0
    %s36 = scalar_select %p35, %s34, 0
    %s37 = ssub.s32 %s33, %s36
    %p38 = scmp.eq.s32.totalorder %s37, 0
    %s40 = sadd.s32 %s39, 1
    %s41 = scalar_select %p38, %s39, %s40
    %p44 = pneg %p38
    %p45 = scmp.eq.s32.totalorder %s11, 1
    %p46 = por %p44, %p45
    %p47 = scmp.ne.s32.totalorder %s39, %s42
    %p48 = scmp.eq.s32.totalorder %s11, 0
    %p49 = por %p47, %p48
    %p50 = scmp.ne.s32.totalorder %s39, %s42
    %p51 = scmp.eq.s32.totalorder %s16, 1
    %p52 = por %p50, %p51
    %p53 = scmp.ne.s32.totalorder %s42, %s43
    %p54 = scmp.eq.s32.totalorder %s16, 0
    %p55 = por %p53, %p54
    %p56 = scmp.ne.s32.totalorder %s42, %s43
    %p57 = scmp.eq.s32.totalorder %s17, 1
    %p58 = por %p56, %p57
    %p60 = scmp.ne.s32.totalorder %s43, %s59
    %p61 = scmp.eq.s32.totalorder %s17, 0
    %p62 = por %p60, %p61
    %s63 = sadd.s32 %s18, %s19
    %p64 = scmp.lt.s32.totalorder %s63, 0
    %s65 = scalar_select %p64, %s63, 0
    %s66 = sadd.s32 %s30, %s26
    %p67 = scmp.lt.s32.totalorder %s66, 0
    %s68 = scalar_select %p67, %s66, 0
    %s69 = ssub.s32 %s65, %s68
    %p70 = scmp.eq.s32.totalorder %s69, 0
    %s72 = sadd.s32 %s71, 1
    %s73 = scalar_select %p70, %s71, %s72
    %p76 = pneg %p70
    %p77 = scmp.eq.s32.totalorder %s11, 1
    %p78 = por %p76, %p77
    %p79 = scmp.ne.s32.totalorder %s71, %s74
    %p80 = scmp.eq.s32.totalorder %s11, 0
    %p81 = por %p79, %p80
    %p82 = scmp.ne.s32.totalorder %s71, %s74
    %p83 = scmp.eq.s32.totalorder %s16, 1
    %p84 = por %p82, %p83
    %p85 = scmp.ne.s32.totalorder %s74, %s75
    %p86 = scmp.eq.s32.totalorder %s16, 0
    %p87 = por %p85, %p86
    %p88 = scmp.ne.s32.totalorder %s74, %s75
    %p89 = scmp.eq.s32.totalorder %s17, 1
    %p90 = por %p88, %p89
    %p92 = scmp.ne.s32.totalorder %s75, %s91
    %p93 = scmp.eq.s32.totalorder %s17, 0
    %p94 = por %p92, %p93
    %s95 = ssub.s32 %s18, %s30
    %p96 = scmp.eq.s32.totalorder %s95, 0
    %s98 = sadd.s32 %s97, 1
    %s99 = scalar_select %p96, %s97, %s98
    %p102 = pneg %p96
    %p103 = scmp.eq.s32.totalorder %s11, 1
    %p104 = por %p102, %p103
    %p105 = scmp.ne.s32.totalorder %s97, %s100
    %p106 = scmp.eq.s32.totalorder %s11, 0
    %p107 = por %p105, %p106
    %p108 = scmp.ne.s32.totalorder %s97, %s100
    %p109 = scmp.eq.s32.totalorder %s16, 1
    %p110 = por %p108, %p109
    %p111 = scmp.ne.s32.totalorder %s100, %s101
    %p112 = scmp.eq.s32.totalorder %s16, 0
    %p113 = por %p111, %p112
    %p114 = scmp.ne.s32.totalorder %s100, %s101
    %p115 = scmp.eq.s32.totalorder %s17, 1
    %p116 = por %p114, %p115
    %p118 = scmp.ne.s32.totalorder %s101, %s117
    %p119 = scmp.eq.s32.totalorder %s17, 0
    %p120 = por %p118, %p119
    %s121 = ssub.s32 %s18, %s30
    %p122 = scmp.eq.s32.totalorder %s121, 0
    %s124 = sadd.s32 %s123, 1
    %s125 = scalar_select %p122, %s123, %s124
    %p128 = pneg %p122
    %p129 = scmp.eq.s32.totalorder %s11, 1
    %p130 = por %p128, %p129
    %p131 = scmp.ne.s32.totalorder %s123, %s126
    %p132 = scmp.eq.s32.totalorder %s11, 0
    %p133 = por %p131, %p132
    %p134 = scmp.ne.s32.totalorder %s123, %s126
    %p135 = scmp.eq.s32.totalorder %s16, 1
    %p136 = por %p134, %p135
    %p137 = scmp.ne.s32.totalorder %s126, %s127
    %p138 = scmp.eq.s32.totalorder %s16, 0
    %p139 = por %p137, %p138
    %p140 = scmp.ne.s32.totalorder %s126, %s127
    %p141 = scmp.eq.s32.totalorder %s17, 1
    %p142 = por %p140, %p141
    %p144 = scmp.ne.s32.totalorder %s127, %s143
    %p145 = scmp.eq.s32.totalorder %s17, 0
    %p146 = por %p144, %p145
    %s147 = ssub.s32 %s18, %s30
    %p148 = scmp.eq.s32.totalorder %s147, 0
    %s150 = sadd.s32 %s149, 1
    %s151 = scalar_select %p148, %s149, %s150
    %p154 = pneg %p148
    %p155 = scmp.eq.s32.totalorder %s11, 1
    %p156 = por %p154, %p155
    %p157 = scmp.ne.s32.totalorder %s149, %s152
    %p158 = scmp.eq.s32.totalorder %s11, 0
    %p159 = por %p157, %p158
    %p160 = scmp.ne.s32.totalorder %s149, %s152
    %p161 = scmp.eq.s32.totalorder %s16, 1
    %p162 = por %p160, %p161
    %p163 = scmp.ne.s32.totalorder %s152, %s153
    %p164 = scmp.eq.s32.totalorder %s16, 0
    %p165 = por %p163, %p164
    %p166 = scmp.ne.s32.totalorder %s152, %s153
    %p167 = scmp.eq.s32.totalorder %s17, 1
    %p168 = por %p166, %p167
    %p170 = scmp.ne.s32.totalorder %s153, %s169
    %p171 = scmp.eq.s32.totalorder %s17, 0
    %p172 = por %p170, %p171
    %p173 = scmp.le.s32.totalorder 1, %s11
    %p174 = scmp.lt.s32.totalorder %s11, 3
    %p175 = pnand %p173, %p174
    %p176 = pneg %p175
    // Predicated region
    $region9: #{bbce_loss_pallas.1} parent=5 // pred_check
      _
    $region10: #{bbce_loss_pallas.1} parent=5 // pred_check_branch
      %178 = sbr.rel (%p175) target = $region12
    $region11: #{bbce_loss_pallas.1} parent=5 // pred_region
      %s179 = ssub.s32 %s11, 1
    $region12: #{bbce_loss_pallas.1} parent=5 // pred_fallthru
      _
    %p180 = scmp.lt.s32.totalorder %s11, 2
    // Predicated region
    $region13: #{bbce_loss_pallas.1} parent=5 // pred_check
      %p181 = pneg %p180
    $region14: #{bbce_loss_pallas.1} parent=5 // pred_check_branch
      %183 = sbr.rel (%p181) target = $region16
    $region15: #{bbce_loss_pallas.1} parent=5 // pred_region
      // Predicated region
      $region17: #{bbce_loss_pallas.1} parent=15 // pred_check
        %p184 = pneg %p49
      $region18: #{bbce_loss_pallas.1} parent=15 // pred_check_branch
        %186 = sbr.rel (%p184) target = $region20
      $region19: #{bbce_loss_pallas.1} parent=15 // pred_region
        %s187 = sadd.s32 %s18, %s19
        %p188 = scmp.lt.s32.totalorder %s187, 0
        %s189 = scalar_select %p188, %s187, 0
        %s190 = smul.u32 2, %s189
        %p191 = scmp.lt.s32.totalorder %s190, 1
        %s192 = scalar_select %p191, %s190, 1
        %s193 = smul.addr %s192, 8
        %s194 = scalar_lea.vmem %s0, %s193
        %s195 = sadd.s32 %s18, %s19
        %p196 = scmp.lt.s32.totalorder %s195, 0
        %s197 = scalar_select %p196, %s195, 0
        %s198 = smul.u32 2, %s197
      $region20: #{bbce_loss_pallas.1} parent=15 // pred_fallthru
        _
      // Predicated region
      $region21: #{bbce_loss_pallas.1} parent=15 // pred_check
        %p199 = pneg %p81
      $region22: #{bbce_loss_pallas.1} parent=15 // pred_check_branch
        %201 = sbr.rel (%p199) target = $region24
      $region23: #{bbce_loss_pallas.1} parent=15 // pred_region
        %s202 = sadd.s32 %s18, %s19
        %p203 = scmp.lt.s32.totalorder %s202, 0
        %s204 = scalar_select %p203, %s202, 0
        %s205 = smul.u32 2, %s204
        %p206 = scmp.lt.s32.totalorder %s205, 1
        %s207 = scalar_select %p206, %s205, 1
        %s208 = smul.addr %s207, 8
        %s209 = scalar_lea.vmem %s1, %s208
        %s210 = sadd.s32 %s18, %s19
        %p211 = scmp.lt.s32.totalorder %s210, 0
        %s212 = scalar_select %p211, %s210, 0
        %s213 = smul.u32 2, %s212
      $region24: #{bbce_loss_pallas.1} parent=15 // pred_fallthru
        _
    $region16: #{bbce_loss_pallas.1} parent=5 // pred_fallthru
      _
    %p214 = scmp.le.s32.totalorder 1, %s11
    %p215 = scmp.lt.s32.totalorder %s11, 3
    %p216 = pnand %p214, %p215
    %p217 = pneg %p216
    // Predicated region
    $region25: #{bbce_loss_pallas.1} parent=5 // pred_check
      _
    $region26: #{bbce_loss_pallas.1} parent=5 // pred_check_branch
      %219 = sbr.rel (%p216) target = $region28
    $region27: #{bbce_loss_pallas.1} parent=5 // pred_region
      %s220 = ssub.s32 %s11, 1
      %s221 = sadd.s32 %s20, %s21
      %p222 = scmp.lt.s32.totalorder %s221, 0
      %s223 = scalar_select %p222, %s221, 0
      %s224 = smul.u32 2, %s223
      %p225 = scmp.lt.s32.totalorder %s224, 1
      %s226 = scalar_select %p225, %s224, 1
      %s227 = smul.addr %s226, 8
      %s228 = scalar_lea.vmem %s0, %s227
      %p229 = pneg %p55
      %p230 = pneg %p52
      %s231 = sadd.s32 %s20, %s21
      %p232 = scmp.lt.s32.totalorder %s231, 0
      %s233 = scalar_select %p232, %s231, 0
      %s234 = smul.u32 2, %s233
      %p235 = scmp.lt.s32.totalorder %s234, 1
      %s236 = scalar_select %p235, %s234, 1
      %s237 = smul.addr %s236, 8
      %s238 = scalar_lea.vmem %s1, %s237
      %p239 = pneg %p87
      %p240 = pneg %p84
      %p241 = pneg %p113
      %p242 = pneg %p110
      %p243 = scmp.lt.s32.totalorder %s20, 1
      %s244 = scalar_select %p243, %s20, 1
      %s245 = smul.addr %s244, 8
      %s246 = scalar_lea.vmem %s2, %s245
      %p247 = pneg %p139
      %p248 = pneg %p136
      %p249 = scmp.lt.s32.totalorder %s20, 1
      %s250 = scalar_select %p249, %s20, 1
      %s251 = smul.addr %s250, 8
      %s252 = scalar_lea.vmem %s3, %s251
      %p253 = pneg %p165
      %p254 = pneg %p162
      %p255 = scmp.lt.s32.totalorder %s20, 1
      %s256 = scalar_select %p255, %s20, 1
      %s257 = smul.addr %s256, 8
      %s258 = scalar_lea.vmem %s4, %s257
      %s259 = sadd.s32 %s20, %s21
      %p260 = scmp.lt.s32.totalorder %s259, 0
      %s261 = scalar_select %p260, %s259, 0
      %s262 = smul.u32 2, %s261
      %p263 = scmp.lt.s32.totalorder %s262, 1
      %s264 = scalar_select %p263, %s262, 1
      %s265 = smul.addr %s264, 8
      %s266 = scalar_lea.vmem %s0, %s265
      %s267 = sadd.s32 %s20, %s21
      %p268 = scmp.lt.s32.totalorder %s267, 0
      %s269 = scalar_select %p268, %s267, 0
      %s270 = smul.u32 2, %s269
      %s271 = sadd.s32 %s20, %s21
      %p272 = scmp.lt.s32.totalorder %s271, 0
      %s273 = scalar_select %p272, %s271, 0
      %s274 = smul.u32 2, %s273
      %p275 = scmp.lt.s32.totalorder %s274, 1
      %s276 = scalar_select %p275, %s274, 1
      %s277 = smul.addr %s276, 8
      %s278 = scalar_lea.vmem %s1, %s277
      %s279 = sadd.s32 %s20, %s21
      %p280 = scmp.lt.s32.totalorder %s279, 0
      %s281 = scalar_select %p280, %s279, 0
      %s282 = smul.u32 2, %s281
      %p283 = scmp.lt.s32.totalorder %s20, 1
      %s284 = scalar_select %p283, %s20, 1
      %s285 = smul.addr %s284, 8
      %s286 = scalar_lea.vmem %s2, %s285
      %p287 = scmp.lt.s32.totalorder %s20, 1
      %s288 = scalar_select %p287, %s20, 1
      %s289 = smul.addr %s288, 8
      %s290 = scalar_lea.vmem %s3, %s289
      %p291 = scmp.lt.s32.totalorder %s20, 1
      %s292 = scalar_select %p291, %s20, 1
      %s293 = smul.addr %s292, 8
      %s294 = scalar_lea.vmem %s4, %s293
      %p295 = scmp.eq.s32.totalorder %s21, 0
      // Predicated region
      $region29: #{bbce_loss_pallas.1} parent=27 // pred_check
        %p296 = pneg %p295
      $region30: #{bbce_loss_pallas.1} parent=27 // pred_check_branch
        %298 = sbr.rel (%p296) target = $region32
      $region31: #{bbce_loss_pallas.1} parent=27 // pred_region
        %299 = vst [vmem:[%s286] sm:$0xff] 0.0
        %300 = vst [vmem:[%s290] sm:$0xff] 0.0
        %301 = vst [vmem:[%s294] sm:$0xff] 0.0
      $region32: #{bbce_loss_pallas.1} parent=27 // pred_fallthru
        _
      %v302 = vld [vmem:[%s266] sm:$0xff]
      %v303 = vld [vmem:[%s266 + $0x8] sm:$0xff]
      %v304 = vld [vmem:[%s278] sm:$0xff]
      %v305 = vld [vmem:[%s278 + $0x8] sm:$0xff]
      %vm306 = vcmp.ne.f32.partialorder %v304, 0.0
      %vm307 = vcmp.ne.f32.partialorder %v305, 0.0
      %v308 = vsub.f32 1.0, %v302
      %v309 = vsub.f32 1.0, %v303
      %v310 = vsel %vm306, %v302, %v308
      %v311 = vsel %vm307, %v303, %v309
      %v312 = vlog2.pop %v310
      %v313 = vmul.f32 %v312, 0.6931472
      %v314 = vlog2.pop %v311
      %v315 = vmul.f32 %v314, 0.6931472
      %v316 = vmax.f32 %v313, -100.0
      %v317 = vmax.f32 %v315, -100.0
      %v318 = vsub.f32 0.0, %v316
      %v319 = vsub.f32 0.0, %v317
      %s320 = sadd.s32 %s20, %s21
      %s321 = smul.u32 %s320, 16
      %v322 = vlaneseq
      %v323 = vshrl.u32 %v322, 7
      %v324 = vadd.s32 %v323, 8
      %v325 = vstv %s321
      %v326 = vadd.s32 %v325, %v323
      %v327 = vadd.s32 %v325, %v324
      %vm328 = vcmp.lt.s32.totalorder %v326, 16
      %vm329 = vcmp.lt.s32.totalorder %v327, 16
      %v330 = vsel %vm328, %v318, 0.0
      %v331 = vsel %vm329, %v319, 0.0
      %v332 = vsel %vm328, %v304, 0.0
      %v333 = vsel %vm329, %v305, 0.0
      %v334 = vmul.f32 %v330, %v332
      %v335 = vmul.f32 %v331, %v333
      %v336 = vsub.f32 %v330, %v334
      %v337 = vsub.f32 %v331, %v335
      %v338 = vld [vmem:[%s286] sm:$0xff]
      %v339 = vadd.f32 %v332, %v333
      %v340 = vadd.f32 %v338, %v339
      %341 = vst [vmem:[%s286] sm:$0xff] %v340
      %v342 = vld [vmem:[%s290] sm:$0xff]
      %v343 = vadd.f32 %v334, %v335
      %v344 = vadd.f32 %v342, %v343
      %345 = vst [vmem:[%s290] sm:$0xff] %v344
      %v346 = vld [vmem:[%s294] sm:$0xff]
      %v347 = vadd.f32 %v336, %v337
      %v348 = vadd.f32 %v346, %v347
      %349 = vst [vmem:[%s294] sm:$0xff] %v348
      %p350 = scmp.lt.s32.totalorder %s20, 1
      %s351 = scalar_select %p350, %s20, 1
      %s352 = smul.addr %s351, 8
      %s353 = scalar_lea.vmem %s2, %s352
      %p354 = scmp.lt.s32.totalorder %s20, 1
      %s355 = scalar_select %p354, %s20, 1
      %s356 = smul.addr %s355, 8
      %s357 = scalar_lea.vmem %s3, %s356
      %p358 = scmp.lt.s32.totalorder %s20, 1
      %s359 = scalar_select %p358, %s20, 1
      %s360 = smul.addr %s359, 8
      %s361 = scalar_lea.vmem %s4, %s360
      // Predicated region
      $region33: #{bbce_loss_pallas.1} parent=27 // pred_check
        %p362 = pneg %p110
      $region34: #{bbce_loss_pallas.1} parent=27 // pred_check_branch
        %364 = sbr.rel (%p362) target = $region36
      $region35: #{bbce_loss_pallas.1} parent=27 // pred_region
        _
      $region36: #{bbce_loss_pallas.1} parent=27 // pred_fallthru
        _
      // Predicated region
      $region37: #{bbce_loss_pallas.1} parent=27 // pred_check
        %p365 = pneg %p136
      $region38: #{bbce_loss_pallas.1} parent=27 // pred_check_branch
        %367 = sbr.rel (%p365) target = $region40
      $region39: #{bbce_loss_pallas.1} parent=27 // pred_region
        _
      $region40: #{bbce_loss_pallas.1} parent=27 // pred_fallthru
        _
      // Predicated region
      $region41: #{bbce_loss_pallas.1} parent=27 // pred_check
        %p368 = pneg %p162
      $region42: #{bbce_loss_pallas.1} parent=27 // pred_check_branch
        %370 = sbr.rel (%p368) target = $region44
      $region43: #{bbce_loss_pallas.1} parent=27 // pred_region
        _
      $region44: #{bbce_loss_pallas.1} parent=27 // pred_fallthru
        _
    $region28: #{bbce_loss_pallas.1} parent=5 // pred_fallthru
      _
    %p371 = scmp.le.s32.totalorder 2, %s11
    // Predicated region
    $region45: #{bbce_loss_pallas.1} parent=5 // pred_check
      %p372 = pneg %p371
    $region46: #{bbce_loss_pallas.1} parent=5 // pred_check_branch
      %374 = sbr.rel (%p372) target = $region48
    $region47: #{bbce_loss_pallas.1} parent=5 // pred_region
      %s375 = ssub.s32 %s11, 2
      // Predicated region
      $region49: #{bbce_loss_pallas.1} parent=47 // pred_check
        %p376 = pneg %p116
      $region50: #{bbce_loss_pallas.1} parent=47 // pred_check_branch
        %378 = sbr.rel (%p376) target = $region52
      $region51: #{bbce_loss_pallas.1} parent=47 // pred_region
        %p379 = scmp.lt.s32.totalorder %s22, 1
        %s380 = scalar_select %p379, %s22, 1
        %s381 = smul.addr %s380, 8
        %s382 = scalar_lea.vmem %s2, %s381
      $region52: #{bbce_loss_pallas.1} parent=47 // pred_fallthru
        _
      // Predicated region
      $region53: #{bbce_loss_pallas.1} parent=47 // pred_check
        %p383 = pneg %p142
      $region54: #{bbce_loss_pallas.1} parent=47 // pred_check_branch
        %385 = sbr.rel (%p383) target = $region56
      $region55: #{bbce_loss_pallas.1} parent=47 // pred_region
        %p386 = scmp.lt.s32.totalorder %s22, 1
        %s387 = scalar_select %p386, %s22, 1
        %s388 = smul.addr %s387, 8
        %s389 = scalar_lea.vmem %s3, %s388
      $region56: #{bbce_loss_pallas.1} parent=47 // pred_fallthru
        _
      // Predicated region
      $region57: #{bbce_loss_pallas.1} parent=47 // pred_check
        %p390 = pneg %p168
      $region58: #{bbce_loss_pallas.1} parent=47 // pred_check_branch
        %392 = sbr.rel (%p390) target = $region60
      $region59: #{bbce_loss_pallas.1} parent=47 // pred_region
        %p393 = scmp.lt.s32.totalorder %s22, 1
        %s394 = scalar_select %p393, %s22, 1
        %s395 = smul.addr %s394, 8
        %s396 = scalar_lea.vmem %s4, %s395
      $region60: #{bbce_loss_pallas.1} parent=47 // pred_fallthru
        _
    $region48: #{bbce_loss_pallas.1} parent=5 // pred_fallthru
      _
  $region6: #{bbce_loss_pallas.1} parent=0 // loop_footer
    %s15 = sadd.s32 1, %s11
  $region7: #{bbce_loss_pallas.1} parent=0 // loop_footer_branch
    %10 = sbr.rel target = $region3
  $region8: #{bbce_loss_pallas.1} parent=0 // loop_exit
    _

</llo_original>
